<compile_context>
chip_gen: v7x
topology: tpu7x:2x2x1
jax: 0.10.0
libtpu: 0.0.40
codegen_flags: <defaults>
</compile_context>

<pallas_src>
import functools

import jax
import jax.numpy as jnp
from jax.experimental import pallas as pl
from jax.experimental.pallas import tpu as pltpu

K = 3
PAD = K // 2

# Deterministic "probability kernel" of the RandomPooling layer (sums to 1).
PROB_KERNEL = tuple(
    tuple(v / 16.0 for v in row)
    for row in ((1.0, 2.0, 1.0), (2.0, 4.0, 2.0), (1.0, 2.0, 1.0))
)
_FLAT_PROBS = [PROB_KERNEL[dy][dx] for dy in range(K) for dx in range(K)]
_CUM_PROBS = []
_acc = 0.0
for _p in _FLAT_PROBS:
    _acc += _p
    _CUM_PROBS.append(_acc)


# ----------------------------------------------------------------------------
# Fused kernel: expected pooling + mask blend + stochastic window pick + clamp
# ----------------------------------------------------------------------------
def _smart_pooling_kernel(xpad2_ref, maskp_ref, u_ref, out_ref, *, H, W):
    """One grid step = one stochastic sample over ALL N*C planes.

    xpad2_ref : (P, H+4, W+4)  x zero-padded by 2
    maskp_ref : (H+2, W+2)     mask zero-padded by 1
    u_ref     : (1, P, H, W)   uniform [0,1) draws for this sample
    out_ref   : (1, P, H, W)
    """
    He, We = H + 2 * PAD, W + 2 * PAD

    xpad2 = xpad2_ref[...]            # (P, H+4, W+4)
    mpad = maskp_ref[...]             # (H+2, W+2), broadcasts over the plane axis

    # Expected pooling computed on the pad-1 extended domain: a "valid" 3x3 conv
    # of the pad-2 input yields xp at every position of the pad-1 domain.
    xp_ext = PROB_KERNEL[0][0] * xpad2[:, 0:He, 0:We]
    for dy in range(K):
        for dx in range(K):
            if dy == 0 and dx == 0:
                continue
            xp_ext = xp_ext + PROB_KERNEL[dy][dx] * xpad2[:, dy:dy + He, dx:dx + We]

    # x on the pad-1 extended domain (zero ring), and the mask blend.
    # On the border ring mpad == 0 and x_ext == 0, so xb_ext is exactly the
    # zero-padded blended plane: xb_ext == pad(xp*mask + x*(1-mask)).
    x_ext = xpad2[:, PAD:PAD + He, PAD:PAD + We]
    xb_ext = x_ext + mpad * (xp_ext - x_ext)          # (P, H+2, W+2)

    # Stochastic pick over the 3x3 window, nested single-compare selects.
    u = u_ref[0]                                       # (P, H, W), uniform [0, 1)
    windows = [xb_ext[:, dy:dy + H, dx:dx + W] for dy in range(K) for dx in range(K)]
    sample = windows[K * K - 1]                        # default: last bucket (u >= cum[-2])
    for k in range(K * K - 2, -1, -1):
        sample = jnp.where(u < _CUM_PROBS[k], windows[k], sample)

    # out = clamp(xb + (RandomPooling(xb) - xb), 0, 1) == clamp(sample, 0, 1)
    out_ref[0] = jnp.clip(sample, 0.0, 1.0)


# ----------------------------------------------------------------------------
# SmartPooling forward (random branch, flush iteration)
# ----------------------------------------------------------------------------
def smart_pooling_forward(x, mask, key, nb_samples=4):
    """x: (N, C, H, W) float32 with N == 1 (the PyTorch broadcast x + cache
    requires batch 1).  mask: (H, W).  Returns (nb_samples * N, C, H, W)."""
    N, C, H, W = x.shape
    assert N == 1, "SmartPooling random branch requires batch size 1 (x + cache broadcast)"
    P = N * C

    planes = x.reshape(P, H, W).astype(jnp.float32)
    # Single tiny wrapper-side pad (pad-2) covers both the conv padding and the
    # zero padding of the blended plane used by RandomPooling.
    xpad2 = jnp.pad(planes, ((0, 0), (2 * PAD, 2 * PAD), (2 * PAD, 2 * PAD)))
    mask_pad = jnp.pad(mask.astype(jnp.float32), ((PAD, PAD), (PAD, PAD)))

    # Host-side uniform draws for the per-pixel categorical pick (deterministic).
    u = jax.random.uniform(key, (nb_samples, P, H, W), dtype=jnp.float32)

    kernel = functools.partial(_smart_pooling_kernel, H=H, W=W)
    out = pl.pallas_call(
        kernel,
        out_shape=jax.ShapeDtypeStruct((nb_samples, P, H, W), jnp.float32),
        grid=(nb_samples,),
        in_specs=[
            # Same block every step -> no re-fetch across the sample axis.
            pl.BlockSpec((P, H + 4 * PAD, W + 4 * PAD), lambda s: (0, 0, 0)),
            pl.BlockSpec((H + 2 * PAD, W + 2 * PAD), lambda s: (0, 0)),
            pl.BlockSpec((1, P, H, W), lambda s: (s, 0, 0, 0)),
        ],
        out_specs=pl.BlockSpec((1, P, H, W), lambda s: (s, 0, 0, 0)),
        compiler_params=pltpu.CompilerParams(
            dimension_semantics=("parallel",),
            vmem_limit_bytes=32 * 1024 * 1024,
        ),
    )(xpad2, mask_pad, u)

    return out.reshape(nb_samples * N, C, H, W)


if __name__ == "__main__":
    # TODO(synk): the nb_iter counter / nb_flushes early-return and the non-random
    # pooling branch are Python-side control flow in the original module; this
    # script exercises the random branch on its flush iteration.
    key = jax.random.PRNGKey(0)
    kx, km, ku = jax.random.split(key, 3)

    N, C, H, W = 1, 4, 16, 16
    nb_samples = 4
    x = jax.random.uniform(kx, (N, C, H, W), dtype=jnp.float32)
    mask = jax.random.bernoulli(km, 0.5, (H, W)).astype(jnp.float32)

    out = smart_pooling_forward(x, mask, ku, nb_samples=nb_samples)
    out = jax.block_until_ready(out)

    assert out.shape == (nb_samples * N, C, H, W), out.shape
    assert bool(jnp.all(out >= 0.0)) and bool(jnp.all(out <= 1.0))
    assert bool(jnp.all(jnp.isfinite(out)))
    print("KERNEL_OK")
</pallas_src>

<mosaic_0001>
module attributes {stable_mosaic.version = 11 : i64} {
  func.func @_smart_pooling_kernel(%arg0: i32, %arg1: memref<4x20x20xf32, #tpu.memory_space<vmem>>, %arg2: memref<18x18xf32, #tpu.memory_space<vmem>>, %arg3: memref<1x4x16x16xf32, #tpu.memory_space<vmem>>, %arg4: memref<1x4x16x16xf32, #tpu.memory_space<vmem>>) attributes {dimension_semantics = [#tpu.dimension_semantics<parallel>], iteration_bounds = array<i64: 4>, scalar_prefetch = 0 : i64, scratch_operands = 0 : i64, tpu.core_type = #tpu.core_type<tc>, window_params = [{pipeline_mode = #tpu.pipeline_mode<synchronous>, transform_indices = @transform_0, window_bounds = array<i64: 4, 20, 20>}, {pipeline_mode = #tpu.pipeline_mode<synchronous>, transform_indices = @transform_1, window_bounds = array<i64: 18, 18>}, {transform_indices = @transform_2, window_bounds = array<i64: 1, 4, 16, 16>}, {transform_indices = @transform_3, window_bounds = array<i64: 1, 4, 16, 16>}]} {
    %c0 = arith.constant 0 : index
    %c0_0 = arith.constant 0 : index
    %c0_1 = arith.constant 0 : index
    %0 = vector.load %arg1[%c0, %c0_0, %c0_1] : memref<4x20x20xf32, #tpu.memory_space<vmem>>, vector<4x20x20xf32>
    %c0_2 = arith.constant 0 : index
    %c0_3 = arith.constant 0 : index
    %1 = vector.load %arg2[%c0_2, %c0_3] : memref<18x18xf32, #tpu.memory_space<vmem>>, vector<18x18xf32>
    %2 = vector.extract_strided_slice %0 {offsets = [0, 0, 0], sizes = [4, 18, 18], strides = [1, 1, 1]} : vector<4x20x20xf32> to vector<4x18x18xf32>
    %cst = arith.constant 6.250000e-02 : f32
    %3 = vector.broadcast %cst : f32 to vector<4x18x18xf32>
    %4 = arith.mulf %3, %2 : vector<4x18x18xf32>
    %5 = vector.extract_strided_slice %0 {offsets = [0, 0, 1], sizes = [4, 18, 18], strides = [1, 1, 1]} : vector<4x20x20xf32> to vector<4x18x18xf32>
    %cst_4 = arith.constant 1.250000e-01 : f32
    %6 = vector.broadcast %cst_4 : f32 to vector<4x18x18xf32>
    %7 = arith.mulf %6, %5 : vector<4x18x18xf32>
    %8 = arith.addf %4, %7 : vector<4x18x18xf32>
    %9 = vector.extract_strided_slice %0 {offsets = [0, 0, 2], sizes = [4, 18, 18], strides = [1, 1, 1]} : vector<4x20x20xf32> to vector<4x18x18xf32>
    %cst_5 = arith.constant 6.250000e-02 : f32
    %10 = vector.broadcast %cst_5 : f32 to vector<4x18x18xf32>
    %11 = arith.mulf %10, %9 : vector<4x18x18xf32>
    %12 = arith.addf %8, %11 : vector<4x18x18xf32>
    %13 = vector.extract_strided_slice %0 {offsets = [0, 1, 0], sizes = [4, 18, 18], strides = [1, 1, 1]} : vector<4x20x20xf32> to vector<4x18x18xf32>
    %cst_6 = arith.constant 1.250000e-01 : f32
    %14 = vector.broadcast %cst_6 : f32 to vector<4x18x18xf32>
    %15 = arith.mulf %14, %13 : vector<4x18x18xf32>
    %16 = arith.addf %12, %15 : vector<4x18x18xf32>
    %17 = vector.extract_strided_slice %0 {offsets = [0, 1, 1], sizes = [4, 18, 18], strides = [1, 1, 1]} : vector<4x20x20xf32> to vector<4x18x18xf32>
    %cst_7 = arith.constant 2.500000e-01 : f32
    %18 = vector.broadcast %cst_7 : f32 to vector<4x18x18xf32>
    %19 = arith.mulf %18, %17 : vector<4x18x18xf32>
    %20 = arith.addf %16, %19 : vector<4x18x18xf32>
    %21 = vector.extract_strided_slice %0 {offsets = [0, 1, 2], sizes = [4, 18, 18], strides = [1, 1, 1]} : vector<4x20x20xf32> to vector<4x18x18xf32>
    %cst_8 = arith.constant 1.250000e-01 : f32
    %22 = vector.broadcast %cst_8 : f32 to vector<4x18x18xf32>
    %23 = arith.mulf %22, %21 : vector<4x18x18xf32>
    %24 = arith.addf %20, %23 : vector<4x18x18xf32>
    %25 = vector.extract_strided_slice %0 {offsets = [0, 2, 0], sizes = [4, 18, 18], strides = [1, 1, 1]} : vector<4x20x20xf32> to vector<4x18x18xf32>
    %cst_9 = arith.constant 6.250000e-02 : f32
    %26 = vector.broadcast %cst_9 : f32 to vector<4x18x18xf32>
    %27 = arith.mulf %26, %25 : vector<4x18x18xf32>
    %28 = arith.addf %24, %27 : vector<4x18x18xf32>
    %29 = vector.extract_strided_slice %0 {offsets = [0, 2, 1], sizes = [4, 18, 18], strides = [1, 1, 1]} : vector<4x20x20xf32> to vector<4x18x18xf32>
    %cst_10 = arith.constant 1.250000e-01 : f32
    %30 = vector.broadcast %cst_10 : f32 to vector<4x18x18xf32>
    %31 = arith.mulf %30, %29 : vector<4x18x18xf32>
    %32 = arith.addf %28, %31 : vector<4x18x18xf32>
    %33 = vector.extract_strided_slice %0 {offsets = [0, 2, 2], sizes = [4, 18, 18], strides = [1, 1, 1]} : vector<4x20x20xf32> to vector<4x18x18xf32>
    %cst_11 = arith.constant 6.250000e-02 : f32
    %34 = vector.broadcast %cst_11 : f32 to vector<4x18x18xf32>
    %35 = arith.mulf %34, %33 : vector<4x18x18xf32>
    %36 = arith.addf %32, %35 : vector<4x18x18xf32>
    %37 = vector.extract_strided_slice %0 {offsets = [0, 1, 1], sizes = [4, 18, 18], strides = [1, 1, 1]} : vector<4x20x20xf32> to vector<4x18x18xf32>
    %38 = arith.subf %36, %37 : vector<4x18x18xf32>
    %39 = vector.shape_cast %1 : vector<18x18xf32> to vector<1x18x18xf32>
    %40 = vector.broadcast %39 : vector<1x18x18xf32> to vector<4x18x18xf32>
    %41 = arith.mulf %40, %38 : vector<4x18x18xf32>
    %42 = arith.addf %37, %41 : vector<4x18x18xf32>
    %c0_12 = arith.constant 0 : index
    %c0_13 = arith.constant 0 : index
    %c0_14 = arith.constant 0 : index
    %c0_15 = arith.constant 0 : index
    %43 = vector.load %arg3[%c0_12, %c0_13, %c0_14, %c0_15] : memref<1x4x16x16xf32, #tpu.memory_space<vmem>>, vector<1x4x16x16xf32>
    %44 = vector.shape_cast %43 : vector<1x4x16x16xf32> to vector<4x16x16xf32>
    %45 = vector.extract_strided_slice %42 {offsets = [0, 0, 0], sizes = [4, 16, 16], strides = [1, 1, 1]} : vector<4x18x18xf32> to vector<4x16x16xf32>
    %46 = vector.extract_strided_slice %42 {offsets = [0, 0, 1], sizes = [4, 16, 16], strides = [1, 1, 1]} : vector<4x18x18xf32> to vector<4x16x16xf32>
    %47 = vector.extract_strided_slice %42 {offsets = [0, 0, 2], sizes = [4, 16, 16], strides = [1, 1, 1]} : vector<4x18x18xf32> to vector<4x16x16xf32>
    %48 = vector.extract_strided_slice %42 {offsets = [0, 1, 0], sizes = [4, 16, 16], strides = [1, 1, 1]} : vector<4x18x18xf32> to vector<4x16x16xf32>
    %49 = vector.extract_strided_slice %42 {offsets = [0, 1, 1], sizes = [4, 16, 16], strides = [1, 1, 1]} : vector<4x18x18xf32> to vector<4x16x16xf32>
    %50 = vector.extract_strided_slice %42 {offsets = [0, 1, 2], sizes = [4, 16, 16], strides = [1, 1, 1]} : vector<4x18x18xf32> to vector<4x16x16xf32>
    %51 = vector.extract_strided_slice %42 {offsets = [0, 2, 0], sizes = [4, 16, 16], strides = [1, 1, 1]} : vector<4x18x18xf32> to vector<4x16x16xf32>
    %52 = vector.extract_strided_slice %42 {offsets = [0, 2, 1], sizes = [4, 16, 16], strides = [1, 1, 1]} : vector<4x18x18xf32> to vector<4x16x16xf32>
    %53 = vector.extract_strided_slice %42 {offsets = [0, 2, 2], sizes = [4, 16, 16], strides = [1, 1, 1]} : vector<4x18x18xf32> to vector<4x16x16xf32>
    %cst_16 = arith.constant 9.375000e-01 : f32
    %54 = vector.broadcast %cst_16 : f32 to vector<4x16x16xf32>
    %55 = arith.cmpf olt, %44, %54 : vector<4x16x16xf32>
    %56 = arith.select %55, %52, %53 : vector<4x16x16xi1>, vector<4x16x16xf32>
    %cst_17 = arith.constant 8.125000e-01 : f32
    %57 = vector.broadcast %cst_17 : f32 to vector<4x16x16xf32>
    %58 = arith.cmpf olt, %44, %57 : vector<4x16x16xf32>
    %59 = arith.select %58, %51, %56 : vector<4x16x16xi1>, vector<4x16x16xf32>
    %cst_18 = arith.constant 7.500000e-01 : f32
    %60 = vector.broadcast %cst_18 : f32 to vector<4x16x16xf32>
    %61 = arith.cmpf olt, %44, %60 : vector<4x16x16xf32>
    %62 = arith.select %61, %50, %59 : vector<4x16x16xi1>, vector<4x16x16xf32>
    %cst_19 = arith.constant 6.250000e-01 : f32
    %63 = vector.broadcast %cst_19 : f32 to vector<4x16x16xf32>
    %64 = arith.cmpf olt, %44, %63 : vector<4x16x16xf32>
    %65 = arith.select %64, %49, %62 : vector<4x16x16xi1>, vector<4x16x16xf32>
    %cst_20 = arith.constant 3.750000e-01 : f32
    %66 = vector.broadcast %cst_20 : f32 to vector<4x16x16xf32>
    %67 = arith.cmpf olt, %44, %66 : vector<4x16x16xf32>
    %68 = arith.select %67, %48, %65 : vector<4x16x16xi1>, vector<4x16x16xf32>
    %cst_21 = arith.constant 2.500000e-01 : f32
    %69 = vector.broadcast %cst_21 : f32 to vector<4x16x16xf32>
    %70 = arith.cmpf olt, %44, %69 : vector<4x16x16xf32>
    %71 = arith.select %70, %47, %68 : vector<4x16x16xi1>, vector<4x16x16xf32>
    %cst_22 = arith.constant 1.875000e-01 : f32
    %72 = vector.broadcast %cst_22 : f32 to vector<4x16x16xf32>
    %73 = arith.cmpf olt, %44, %72 : vector<4x16x16xf32>
    %74 = arith.select %73, %46, %71 : vector<4x16x16xi1>, vector<4x16x16xf32>
    %cst_23 = arith.constant 6.250000e-02 : f32
    %75 = vector.broadcast %cst_23 : f32 to vector<4x16x16xf32>
    %76 = arith.cmpf olt, %44, %75 : vector<4x16x16xf32>
    %77 = arith.select %76, %45, %74 : vector<4x16x16xi1>, vector<4x16x16xf32>
    %cst_24 = arith.constant 0.000000e+00 : f32
    %cst_25 = arith.constant 1.000000e+00 : f32
    %78 = vector.broadcast %cst_24 : f32 to vector<4x16x16xf32>
    %79 = arith.maximumf %78, %77 : vector<4x16x16xf32>
    %80 = vector.broadcast %cst_25 : f32 to vector<4x16x16xf32>
    %81 = arith.minimumf %80, %79 : vector<4x16x16xf32>
    %c0_26 = arith.constant 0 : index
    %c0_27 = arith.constant 0 : index
    %c0_28 = arith.constant 0 : index
    %c0_29 = arith.constant 0 : index
    %82 = vector.load %arg4[%c0_26, %c0_27, %c0_28, %c0_29] : memref<1x4x16x16xf32, #tpu.memory_space<vmem>>, vector<1x4x16x16xf32>
    %83 = vector.shape_cast %82 : vector<1x4x16x16xf32> to vector<4x16x16xf32>
    %84 = vector.shape_cast %81 : vector<4x16x16xf32> to vector<1x4x16x16xf32>
    tpu.vector_store %arg4[%c0_26, %c0_27, %c0_28, %c0_29], %84 {strides = array<i32>} : memref<1x4x16x16xf32, #tpu.memory_space<vmem>>, vector<1x4x16x16xf32>,
    return
  }
  func.func @transform_0(%arg0: i32) -> (i32, i32, i32) {
    %c0_i32 = arith.constant 0 : i32
    %c0_i32_0 = arith.constant 0 : i32
    %c0_i32_1 = arith.constant 0 : i32
    %c0_i32_2 = arith.constant 0 : i32
    return %c0_i32, %c0_i32_0, %c0_i32_1 : i32, i32, i32
  }
  func.func @transform_1(%arg0: i32) -> (i32, i32) {
    %c0_i32 = arith.constant 0 : i32
    %c0_i32_0 = arith.constant 0 : i32
    %c0_i32_1 = arith.constant 0 : i32
    return %c0_i32, %c0_i32_0 : i32, i32
  }
  func.func @transform_2(%arg0: i32) -> (i32, i32, i32, i32) {
    %c0_i32 = arith.constant 0 : i32
    %c0_i32_0 = arith.constant 0 : i32
    %c0_i32_1 = arith.constant 0 : i32
    %c0_i32_2 = arith.constant 0 : i32
    return %arg0, %c0_i32, %c0_i32_0, %c0_i32_1 : i32, i32, i32, i32
  }
  func.func @transform_3(%arg0: i32) -> (i32, i32, i32, i32) {
    %c0_i32 = arith.constant 0 : i32
    %c0_i32_0 = arith.constant 0 : i32
    %c0_i32_1 = arith.constant 0 : i32
    %c0_i32_2 = arith.constant 0 : i32
    return %arg0, %c0_i32, %c0_i32_0, %c0_i32_1 : i32, i32, i32, i32
  }
}

</mosaic_0001>

<llo_original>
// kernel: tpu_custom_call.1
$region0: #{tpu_custom_call.1}
  #allocation0 [shape = 'u32[]', space=smem, size = 0x4, offset = 0x4, fixed_abs, tag = 'smem constant byte address 0x4 - core index']
  #allocation1 [shape = 'u32[144,128]{1,0:T(1,128)}', space=vmem, size = 0x12000, scoped, tag = 'internal scratch']
  %s0 = inlined_call_operand.vmem [shape: f32[4,20,20], index: 0, kind: input, shape index: {}]
  %s1 = inlined_call_operand.vmem [shape: f32[18,18], index: 1, kind: input, shape index: {}]
  %s2 = inlined_call_operand.hbm [shape: f32[4,4,16,16], index: 2, kind: input, shape index: {}]
  %s3 = inlined_call_operand.hbm [shape: f32[4,4,16,16], index: 3, kind: output, shape index: {}]
  %s4 = sld [smem:[#allocation0]]
  $region49: #{tpu_custom_call.1} parent=0
    _
  %s6 = ssub.s32 1, %s4
  %s7 = scalar_select 0, %s6, %s4
  $region1: #{tpu_custom_call.1} parent=0
    #allocation2 [shape = 'u8[65536]{0}', space=vmem, size = 0x10000, scoped, tag = 'input window, operand 2']
    #allocation3 [shape = 's32[2]{0}', space=sflag, size = 0x8, scoped, tag = 'scoped memory for tpu_custom_call.1']
    #allocation4 [shape = 's32[2]{0}', space=sflag, size = 0x8, scoped, tag = 'scoped memory for tpu_custom_call.1']
    #allocation5 [shape = 'u8[65536]{0}', space=vmem, size = 0x10000, scoped, tag = 'output window, operand 0']
    %8 = vsyncpa [#allocation3], 0
    %s9 = scalar_lea.sflag [#allocation3], 1
    %10 = vsyncpa %s9, 0
    %11 = vsyncpa [#allocation4], 0
    %s12 = scalar_lea.sflag [#allocation4], 1
    %13 = vsyncpa %s12, 0
    loop: start=0, step=1, limit=6
    $region2: #{tpu_custom_call.1} parent=1 // loop_pre_header
      _
    $region3: #{tpu_custom_call.1} parent=1 // loop_header
      %s15 = sphi 0, %s19
      %p16 = scmp.ge.s32.totalorder %s15, 6
      %s23 = sphi 0, %s23
      %s25 = sphi 0, %s23
      %s26 = sphi 0, %s25
      %s40 = sphi 0, %s26
      %s44 = sphi 0, %s44
      %s46 = sphi 0, %s44
      %s47 = sphi 0, %s46
      %s61 = sphi 0, %s47
      %s67 = sphi 0, %s69
      %s70 = sphi 0, %s67
      %s71 = sphi 0, %s70
      %s87 = sphi 0, %s71
      %s93 = sphi 0, %s95
      %s96 = sphi 0, %s93
      %s97 = sphi 0, %s96
      %s113 = sphi 0, %s97
    $region4: #{tpu_custom_call.1} parent=1 // loop_header_branch
      %18 = sbr.rel (%p16) target = $region8
    $region5: #{tpu_custom_call.1} parent=1 // loop_body
      %s20 = ssub.s32 %s15, 1
      %s21 = ssub.s32 %s15, 2
      %s22 = sadd.s32 %s15, 1
      %s24 = sadd.s32 %s23, 1
      %p27 = scmp.eq.s32.totalorder %s15, 3
      %p28 = scmp.ne.s32.totalorder %s23, %s25
      %p29 = scmp.eq.s32.totalorder %s15, 0
      %p30 = por %p28, %p29
      %p31 = scmp.ne.s32.totalorder %s23, %s25
      %p32 = scmp.eq.s32.totalorder %s20, 3
      %p33 = por %p31, %p32
      %p34 = scmp.ne.s32.totalorder %s25, %s26
      %p35 = scmp.eq.s32.totalorder %s20, 0
      %p36 = por %p34, %p35
      %p37 = scmp.ne.s32.totalorder %s25, %s26
      %p38 = scmp.eq.s32.totalorder %s21, 3
      %p39 = por %p37, %p38
      %p41 = scmp.ne.s32.totalorder %s26, %s40
      %p42 = scmp.eq.s32.totalorder %s21, 0
      %p43 = por %p41, %p42
      %s45 = sadd.s32 %s44, 1
      %p48 = scmp.eq.s32.totalorder %s15, 3
      %p49 = scmp.ne.s32.totalorder %s44, %s46
      %p50 = scmp.eq.s32.totalorder %s15, 0
      %p51 = por %p49, %p50
      %p52 = scmp.ne.s32.totalorder %s44, %s46
      %p53 = scmp.eq.s32.totalorder %s20, 3
      %p54 = por %p52, %p53
      %p55 = scmp.ne.s32.totalorder %s46, %s47
      %p56 = scmp.eq.s32.totalorder %s20, 0
      %p57 = por %p55, %p56
      %p58 = scmp.ne.s32.totalorder %s46, %s47
      %p59 = scmp.eq.s32.totalorder %s21, 3
      %p60 = por %p58, %p59
      %p62 = scmp.ne.s32.totalorder %s47, %s61
      %p63 = scmp.eq.s32.totalorder %s21, 0
      %p64 = por %p62, %p63
      %s65 = ssub.s32 %s15, %s22
      %p66 = scmp.eq.s32.totalorder %s65, 0
      %s68 = sadd.s32 %s67, 1
      %s69 = scalar_select %p66, %s67, %s68
      %p72 = pneg %p66
      %p73 = scmp.eq.s32.totalorder %s15, 3
      %p74 = por %p72, %p73
      %p75 = scmp.ne.s32.totalorder %s67, %s70
      %p76 = scmp.eq.s32.totalorder %s15, 0
      %p77 = por %p75, %p76
      %p78 = scmp.ne.s32.totalorder %s67, %s70
      %p79 = scmp.eq.s32.totalorder %s20, 3
      %p80 = por %p78, %p79
      %p81 = scmp.ne.s32.totalorder %s70, %s71
      %p82 = scmp.eq.s32.totalorder %s20, 0
      %p83 = por %p81, %p82
      %p84 = scmp.ne.s32.totalorder %s70, %s71
      %p85 = scmp.eq.s32.totalorder %s21, 3
      %p86 = por %p84, %p85
      %p88 = scmp.ne.s32.totalorder %s71, %s87
      %p89 = scmp.eq.s32.totalorder %s21, 0
      %p90 = por %p88, %p89
      %s91 = ssub.s32 %s15, %s22
      %p92 = scmp.eq.s32.totalorder %s91, 0
      %s94 = sadd.s32 %s93, 1
      %s95 = scalar_select %p92, %s93, %s94
      %p98 = pneg %p92
      %p99 = scmp.eq.s32.totalorder %s15, 3
      %p100 = por %p98, %p99
      %p101 = scmp.ne.s32.totalorder %s93, %s96
      %p102 = scmp.eq.s32.totalorder %s15, 0
      %p103 = por %p101, %p102
      %p104 = scmp.ne.s32.totalorder %s93, %s96
      %p105 = scmp.eq.s32.totalorder %s20, 3
      %p106 = por %p104, %p105
      %p107 = scmp.ne.s32.totalorder %s96, %s97
      %p108 = scmp.eq.s32.totalorder %s20, 0
      %p109 = por %p107, %p108
      %p110 = scmp.ne.s32.totalorder %s96, %s97
      %p111 = scmp.eq.s32.totalorder %s21, 3
      %p112 = por %p110, %p111
      %p114 = scmp.ne.s32.totalorder %s97, %s113
      %p115 = scmp.eq.s32.totalorder %s21, 0
      %p116 = por %p114, %p115
      %p117 = scmp.le.s32.totalorder 1, %s15
      %p118 = scmp.lt.s32.totalorder %s15, 5
      %p119 = pnand %p117, %p118
      %p120 = pneg %p119
      // Predicated region
      $region9: #{tpu_custom_call.1} parent=5 // pred_check
        _
      $region10: #{tpu_custom_call.1} parent=5 // pred_check_branch
        %122 = sbr.rel (%p119) target = $region12
      $region11: #{tpu_custom_call.1} parent=5 // pred_region
        %s123 = ssub.s32 %s15, 1
        // Predicated region
        $region13: #{tpu_custom_call.1} parent=11 // pred_check
          %p124 = pneg %p36
        $region14: #{tpu_custom_call.1} parent=11 // pred_check_branch
          %126 = sbr.rel (%p124) target = $region16
        $region15: #{tpu_custom_call.1} parent=11 // pred_region
          _
        $region16: #{tpu_custom_call.1} parent=11 // pred_fallthru
          _
        // Predicated region
        $region17: #{tpu_custom_call.1} parent=11 // pred_check
          %p127 = pneg %p57
        $region18: #{tpu_custom_call.1} parent=11 // pred_check_branch
          %129 = sbr.rel (%p127) target = $region20
        $region19: #{tpu_custom_call.1} parent=11 // pred_region
          _
        $region20: #{tpu_custom_call.1} parent=11 // pred_fallthru
          _
      $region12: #{tpu_custom_call.1} parent=5 // pred_fallthru
        _
      %p130 = scmp.lt.s32.totalorder %s15, 4
      // Predicated region
      $region21: #{tpu_custom_call.1} parent=5 // pred_check
        %p131 = pneg %p130
      $region22: #{tpu_custom_call.1} parent=5 // pred_check_branch
        %133 = sbr.rel (%p131) target = $region24
      $region23: #{tpu_custom_call.1} parent=5 // pred_region
        // Predicated region
        $region25: #{tpu_custom_call.1} parent=23 // pred_check
          %p134 = pneg %p77
        $region26: #{tpu_custom_call.1} parent=23 // pred_check_branch
          %136 = sbr.rel (%p134) target = $region28
        $region27: #{tpu_custom_call.1} parent=23 // pred_region
          %s137 = sand.u32 %s67, 1
          %s138 = scalar_lea.sflag [#allocation3], %s137
          %s139 = sand.u32 %s67, 1
          %s140 = smul.addr %s139, 64
          %s141 = scalar_lea.vmem [#allocation2], %s140
          %s143 = ssub.s32 1024, 1024
          %144 = vsyncadd %s138, %s143
          %s145 = smul.addr %s15, 8
          %s146 = smul.addr %s145, 128
          %s147 = scalar_lea.hbm %s2, %s146
          %s148 = sshll.u32 %s141, 4
          %s149 = int_to_ptr.vmem [resolvable:$true] %s148
          %154 = dma.hbm_to_vmem [thread:$0]  %s147, 1024, %s149, %s138, 128, 128, 8
        $region28: #{tpu_custom_call.1} parent=23 // pred_fallthru
          _
      $region24: #{tpu_custom_call.1} parent=5 // pred_fallthru
        _
      %p155 = scmp.le.s32.totalorder 1, %s15
      %p156 = scmp.lt.s32.totalorder %s15, 5
      %p157 = pnand %p155, %p156
      %p158 = pneg %p157
      // Predicated region
      $region29: #{tpu_custom_call.1} parent=5 // pred_check
        _
      $region30: #{tpu_custom_call.1} parent=5 // pred_check_branch
        %160 = sbr.rel (%p157) target = $region32
      $region31: #{tpu_custom_call.1} parent=5 // pred_region
        %s161 = ssub.s32 %s15, 1
        %s162 = sand.u32 %s70, 1
        %s163 = scalar_lea.sflag [#allocation3], %s162
        %s164 = sand.u32 %s70, 1
        %s165 = smul.addr %s164, 64
        %s166 = scalar_lea.vmem [#allocation2], %s165
        // Predicated region
        $region33: #{tpu_custom_call.1} parent=31 // pred_check
          %p167 = pneg %p83
        $region34: #{tpu_custom_call.1} parent=31 // pred_check_branch
          %169 = sbr.rel (%p167) target = $region36
        $region35: #{tpu_custom_call.1} parent=31 // pred_region
          %170 = dma.done %s163, 1024
        $region36: #{tpu_custom_call.1} parent=31 // pred_fallthru
          _
        %p171 = pneg %p36
        %p172 = pneg %p33
        %p173 = pneg %p57
        %p174 = pneg %p54
        %s175 = sand.u32 %s70, 1
        %s176 = scalar_lea.sflag [#allocation3], %s175
        %s177 = sand.u32 %s70, 1
        %s178 = smul.addr %s177, 64
        %s179 = scalar_lea.vmem [#allocation2], %s178
        %p180 = pneg %p83
        %p181 = pneg %p80
        %p182 = pneg %p109
        %p183 = pneg %p106
        %s184 = sand.u32 %s96, 1
        %s185 = scalar_lea.sflag [#allocation4], %s184
        %s186 = sand.u32 %s96, 1
        %s187 = smul.addr %s186, 64
        %s188 = scalar_lea.vmem [#allocation5], %s187
        %v189 = vld [vmem:[%s0] sm:$0xff]
        %v190 = vld [vmem:[%s0 + $0x8] sm:$0xff]
        %v191 = vld [vmem:[%s0 + $0x10] sm:$0xf]
        %v192 = vld [vmem:[%s0 + $0x18] sm:$0xff]
        %v193 = vld [vmem:[%s0 + $0x20] sm:$0xff]
        %v194 = vld [vmem:[%s0 + $0x28] sm:$0xf]
        %v195 = vld [vmem:[%s0 + $0x30] sm:$0xff]
        %v196 = vld [vmem:[%s0 + $0x38] sm:$0xff]
        %v197 = vld [vmem:[%s0 + $0x40] sm:$0xf]
        %v198 = vld [vmem:[%s0 + $0x48] sm:$0xff]
        %v199 = vld [vmem:[%s0 + $0x50] sm:$0xff]
        %v200 = vld [vmem:[%s0 + $0x58] sm:$0xf]
        %v201 = vld [vmem:[%s1] sm:$0xff]
        %v202 = vld [vmem:[%s1 + $0x8] sm:$0xff]
        %v203 = vld [vmem:[%s1 + $0x10] sm:$0x3]
        %v204 = vmul.f32 %v189, 0.0625
        %v205 = vmul.f32 %v190, 0.0625
        %v206 = vmul.f32 %v191, 0.0625
        %v207 = vmul.f32 %v192, 0.0625
        %v208 = vmul.f32 %v193, 0.0625
        %v209 = vmul.f32 %v194, 0.0625
        %v210 = vmul.f32 %v195, 0.0625
        %v211 = vmul.f32 %v196, 0.0625
        %v212 = vmul.f32 %v197, 0.0625
        %v213 = vmul.f32 %v198, 0.0625
        %v214 = vmul.f32 %v199, 0.0625
        %v215 = vmul.f32 %v200, 0.0625
        %v216 = vmul.f32 %v189, 0.125
        %v217 = vmul.f32 %v190, 0.125
        %v218 = vmul.f32 %v191, 0.125
        %v219 = vmul.f32 %v192, 0.125
        %v220 = vmul.f32 %v193, 0.125
        %v221 = vmul.f32 %v194, 0.125
        %v222 = vmul.f32 %v195, 0.125
        %v223 = vmul.f32 %v196, 0.125
        %v224 = vmul.f32 %v197, 0.125
        %v225 = vmul.f32 %v198, 0.125
        %v226 = vmul.f32 %v199, 0.125
        %v227 = vmul.f32 %v200, 0.125
        %240 = vrot.lane.b32.xlu0 %v216, 127
        %v241 = vpop.permute.xlu0 %240
        %242 = vrot.lane.b32.xlu0 %v217, 127
        %v243 = vpop.permute.xlu0 %242
        %244 = vrot.lane.b32.xlu0 %v218, 127
        %v245 = vpop.permute.xlu0 %244
        %246 = vrot.lane.b32.xlu0 %v219, 127
        %v247 = vpop.permute.xlu0 %246
        %248 = vrot.lane.b32.xlu0 %v220, 127
        %v249 = vpop.permute.xlu0 %248
        %250 = vrot.lane.b32.xlu0 %v221, 127
        %v251 = vpop.permute.xlu0 %250
        %252 = vrot.lane.b32.xlu0 %v222, 127
        %v253 = vpop.permute.xlu0 %252
        %254 = vrot.lane.b32.xlu0 %v223, 127
        %v255 = vpop.permute.xlu0 %254
        %256 = vrot.lane.b32.xlu0 %v224, 127
        %v257 = vpop.permute.xlu0 %256
        %258 = vrot.lane.b32.xlu0 %v225, 127
        %v259 = vpop.permute.xlu0 %258
        %260 = vrot.lane.b32.xlu0 %v226, 127
        %v261 = vpop.permute.xlu0 %260
        %262 = vrot.lane.b32.xlu0 %v227, 127
        %v263 = vpop.permute.xlu0 %262
        %v276 = vadd.f32 %v204, %v241
        %v277 = vadd.f32 %v205, %v243
        %v278 = vadd.f32 %v206, %v245
        %v279 = vadd.f32 %v207, %v247
        %v280 = vadd.f32 %v208, %v249
        %v281 = vadd.f32 %v209, %v251
        %v282 = vadd.f32 %v210, %v253
        %v283 = vadd.f32 %v211, %v255
        %v284 = vadd.f32 %v212, %v257
        %v285 = vadd.f32 %v213, %v259
        %v286 = vadd.f32 %v214, %v261
        %v287 = vadd.f32 %v215, %v263
        %300 = vrot.lane.b32.xlu0 %v204, 126
        %v301 = vpop.permute.xlu0 %300
        %302 = vrot.lane.b32.xlu0 %v205, 126
        %v303 = vpop.permute.xlu0 %302
        %304 = vrot.lane.b32.xlu0 %v206, 126
        %v305 = vpop.permute.xlu0 %304
        %306 = vrot.lane.b32.xlu0 %v207, 126
        %v307 = vpop.permute.xlu0 %306
        %308 = vrot.lane.b32.xlu0 %v208, 126
        %v309 = vpop.permute.xlu0 %308
        %310 = vrot.lane.b32.xlu0 %v209, 126
        %v311 = vpop.permute.xlu0 %310
        %312 = vrot.lane.b32.xlu0 %v210, 126
        %v313 = vpop.permute.xlu0 %312
        %314 = vrot.lane.b32.xlu0 %v211, 126
        %v315 = vpop.permute.xlu0 %314
        %316 = vrot.lane.b32.xlu0 %v212, 126
        %v317 = vpop.permute.xlu0 %316
        %318 = vrot.lane.b32.xlu0 %v213, 126
        %v319 = vpop.permute.xlu0 %318
        %320 = vrot.lane.b32.xlu0 %v214, 126
        %v321 = vpop.permute.xlu0 %320
        %322 = vrot.lane.b32.xlu0 %v215, 126
        %v323 = vpop.permute.xlu0 %322
        %v336 = vadd.f32 %v276, %v301
        %v337 = vadd.f32 %v277, %v303
        %v338 = vadd.f32 %v278, %v305
        %v339 = vadd.f32 %v279, %v307
        %v340 = vadd.f32 %v280, %v309
        %v341 = vadd.f32 %v281, %v311
        %v342 = vadd.f32 %v282, %v313
        %v343 = vadd.f32 %v283, %v315
        %v344 = vadd.f32 %v284, %v317
        %v345 = vadd.f32 %v285, %v319
        %v346 = vadd.f32 %v286, %v321
        %v347 = vadd.f32 %v287, %v323
        %vm348 = vcmask 1046528
        %v349 = vrot.slane %v216, 1
        %v350 = vrot.slane %v217, 1
        %v351 = vsel %vm348, %v349, %v350
        %v352 = vrot.slane %v218, 1
        %v353 = vsel %vm348, %v350, %v352
        %v354 = vrot.slane %v219, 1
        %v355 = vrot.slane %v220, 1
        %v356 = vsel %vm348, %v354, %v355
        %v357 = vrot.slane %v221, 1
        %v358 = vsel %vm348, %v355, %v357
        %v359 = vrot.slane %v222, 1
        %v360 = vrot.slane %v223, 1
        %v361 = vsel %vm348, %v359, %v360
        %v362 = vrot.slane %v224, 1
        %v363 = vsel %vm348, %v360, %v362
        %v364 = vrot.slane %v225, 1
        %v365 = vrot.slane %v226, 1
        %v366 = vsel %vm348, %v364, %v365
        %v367 = vrot.slane %v227, 1
        %v368 = vsel %vm348, %v365, %v367
        %v381 = vadd.f32 %v336, %v351
        %v382 = vadd.f32 %v337, %v353
        %v383 = vadd.f32 %v338, %v352
        %v384 = vadd.f32 %v339, %v356
        %v385 = vadd.f32 %v340, %v358
        %v386 = vadd.f32 %v341, %v357
        %v387 = vadd.f32 %v342, %v361
        %v388 = vadd.f32 %v343, %v363
        %v389 = vadd.f32 %v344, %v362
        %v390 = vadd.f32 %v345, %v366
        %v391 = vadd.f32 %v346, %v368
        %v392 = vadd.f32 %v347, %v367
        %v393 = vmul.f32 %v189, 0.25
        %v394 = vmul.f32 %v190, 0.25
        %v395 = vmul.f32 %v191, 0.25
        %v396 = vmul.f32 %v192, 0.25
        %v397 = vmul.f32 %v193, 0.25
        %v398 = vmul.f32 %v194, 0.25
        %v399 = vmul.f32 %v195, 0.25
        %v400 = vmul.f32 %v196, 0.25
        %v401 = vmul.f32 %v197, 0.25
        %v402 = vmul.f32 %v198, 0.25
        %v403 = vmul.f32 %v199, 0.25
        %v404 = vmul.f32 %v200, 0.25
        %v417 = vrot.slane %v393, 1
        %v418 = vrot.slane %v394, 1
        %v419 = vsel %vm348, %v417, %v418
        %v420 = vrot.slane %v395, 1
        %v421 = vsel %vm348, %v418, %v420
        %v422 = vrot.slane %v396, 1
        %v423 = vrot.slane %v397, 1
        %v424 = vsel %vm348, %v422, %v423
        %v425 = vrot.slane %v398, 1
        %v426 = vsel %vm348, %v423, %v425
        %v427 = vrot.slane %v399, 1
        %v428 = vrot.slane %v400, 1
        %v429 = vsel %vm348, %v427, %v428
        %v430 = vrot.slane %v401, 1
        %v431 = vsel %vm348, %v428, %v430
        %v432 = vrot.slane %v402, 1
        %v433 = vrot.slane %v403, 1
        %v434 = vsel %vm348, %v432, %v433
        %v435 = vrot.slane %v404, 1
        %v436 = vsel %vm348, %v433, %v435
        %437 = vrot.lane.b32.xlu0 %v419, 127
        %v438 = vpop.permute.xlu0 %437
        %439 = vrot.lane.b32.xlu0 %v421, 127
        %v440 = vpop.permute.xlu0 %439
        %441 = vrot.lane.b32.xlu0 %v420, 127
        %v442 = vpop.permute.xlu0 %441
        %443 = vrot.lane.b32.xlu0 %v424, 127
        %v444 = vpop.permute.xlu0 %443
        %445 = vrot.lane.b32.xlu0 %v426, 127
        %v446 = vpop.permute.xlu0 %445
        %447 = vrot.lane.b32.xlu0 %v425, 127
        %v448 = vpop.permute.xlu0 %447
        %449 = vrot.lane.b32.xlu0 %v429, 127
        %v450 = vpop.permute.xlu0 %449
        %451 = vrot.lane.b32.xlu0 %v431, 127
        %v452 = vpop.permute.xlu0 %451
        %453 = vrot.lane.b32.xlu0 %v430, 127
        %v454 = vpop.permute.xlu0 %453
        %455 = vrot.lane.b32.xlu0 %v434, 127
        %v456 = vpop.permute.xlu0 %455
        %457 = vrot.lane.b32.xlu0 %v436, 127
        %v458 = vpop.permute.xlu0 %457
        %459 = vrot.lane.b32.xlu0 %v435, 127
        %v460 = vpop.permute.xlu0 %459
        %v473 = vadd.f32 %v381, %v438
        %v474 = vadd.f32 %v382, %v440
        %v475 = vadd.f32 %v383, %v442
        %v476 = vadd.f32 %v384, %v444
        %v477 = vadd.f32 %v385, %v446
        %v478 = vadd.f32 %v386, %v448
        %v479 = vadd.f32 %v387, %v450
        %v480 = vadd.f32 %v388, %v452
        %v481 = vadd.f32 %v389, %v454
        %v482 = vadd.f32 %v390, %v456
        %v483 = vadd.f32 %v391, %v458
        %v484 = vadd.f32 %v392, %v460
        %485 = vrot.lane.b32.xlu0 %v351, 126
        %v486 = vpop.permute.xlu0 %485
        %487 = vrot.lane.b32.xlu0 %v353, 126
        %v488 = vpop.permute.xlu0 %487
        %489 = vrot.lane.b32.xlu0 %v352, 126
        %v490 = vpop.permute.xlu0 %489
        %491 = vrot.lane.b32.xlu0 %v356, 126
        %v492 = vpop.permute.xlu0 %491
        %493 = vrot.lane.b32.xlu0 %v358, 126
        %v494 = vpop.permute.xlu0 %493
        %495 = vrot.lane.b32.xlu0 %v357, 126
        %v496 = vpop.permute.xlu0 %495
        %497 = vrot.lane.b32.xlu0 %v361, 126
        %v498 = vpop.permute.xlu0 %497
        %499 = vrot.lane.b32.xlu0 %v363, 126
        %v500 = vpop.permute.xlu0 %499
        %501 = vrot.lane.b32.xlu0 %v362, 126
        %v502 = vpop.permute.xlu0 %501
        %503 = vrot.lane.b32.xlu0 %v366, 126
        %v504 = vpop.permute.xlu0 %503
        %505 = vrot.lane.b32.xlu0 %v368, 126
        %v506 = vpop.permute.xlu0 %505
        %507 = vrot.lane.b32.xlu0 %v367, 126
        %v508 = vpop.permute.xlu0 %507
        %v521 = vadd.f32 %v473, %v486
        %v522 = vadd.f32 %v474, %v488
        %v523 = vadd.f32 %v475, %v490
        %v524 = vadd.f32 %v476, %v492
        %v525 = vadd.f32 %v477, %v494
        %v526 = vadd.f32 %v478, %v496
        %v527 = vadd.f32 %v479, %v498
        %v528 = vadd.f32 %v480, %v500
        %v529 = vadd.f32 %v481, %v502
        %v530 = vadd.f32 %v482, %v504
        %v531 = vadd.f32 %v483, %v506
        %v532 = vadd.f32 %v484, %v508
        %vm533 = vcmask 1045504
        %v534 = vrot.slane %v204, 2
        %v535 = vrot.slane %v205, 2
        %v536 = vsel %vm533, %v534, %v535
        %v537 = vrot.slane %v206, 2
        %v538 = vsel %vm533, %v535, %v537
        %v539 = vrot.slane %v207, 2
        %v540 = vrot.slane %v208, 2
        %v541 = vsel %vm533, %v539, %v540
        %v542 = vrot.slane %v209, 2
        %v543 = vsel %vm533, %v540, %v542
        %v544 = vrot.slane %v210, 2
        %v545 = vrot.slane %v211, 2
        %v546 = vsel %vm533, %v544, %v545
        %v547 = vrot.slane %v212, 2
        %v548 = vsel %vm533, %v545, %v547
        %v549 = vrot.slane %v213, 2
        %v550 = vrot.slane %v214, 2
        %v551 = vsel %vm533, %v549, %v550
        %v552 = vrot.slane %v215, 2
        %v553 = vsel %vm533, %v550, %v552
        %v566 = vadd.f32 %v521, %v536
        %v567 = vadd.f32 %v522, %v538
        %v568 = vadd.f32 %v523, %v537
        %v569 = vadd.f32 %v524, %v541
        %v570 = vadd.f32 %v525, %v543
        %v571 = vadd.f32 %v526, %v542
        %v572 = vadd.f32 %v527, %v546
        %v573 = vadd.f32 %v528, %v548
        %v574 = vadd.f32 %v529, %v547
        %v575 = vadd.f32 %v530, %v551
        %v576 = vadd.f32 %v531, %v553
        %v577 = vadd.f32 %v532, %v552
        %v578 = vrot.slane %v216, 2
        %v579 = vrot.slane %v217, 2
        %v580 = vsel %vm533, %v578, %v579
        %v581 = vrot.slane %v218, 2
        %v582 = vsel %vm533, %v579, %v581
        %v583 = vrot.slane %v219, 2
        %v584 = vrot.slane %v220, 2
        %v585 = vsel %vm533, %v583, %v584
        %v586 = vrot.slane %v221, 2
        %v587 = vsel %vm533, %v584, %v586
        %v588 = vrot.slane %v222, 2
        %v589 = vrot.slane %v223, 2
        %v590 = vsel %vm533, %v588, %v589
        %v591 = vrot.slane %v224, 2
        %v592 = vsel %vm533, %v589, %v591
        %v593 = vrot.slane %v225, 2
        %v594 = vrot.slane %v226, 2
        %v595 = vsel %vm533, %v593, %v594
        %v596 = vrot.slane %v227, 2
        %v597 = vsel %vm533, %v594, %v596
        %598 = vrot.lane.b32.xlu0 %v580, 127
        %v599 = vpop.permute.xlu0 %598
        %600 = vrot.lane.b32.xlu0 %v582, 127
        %v601 = vpop.permute.xlu0 %600
        %602 = vrot.lane.b32.xlu0 %v581, 127
        %v603 = vpop.permute.xlu0 %602
        %604 = vrot.lane.b32.xlu0 %v585, 127
        %v605 = vpop.permute.xlu0 %604
        %606 = vrot.lane.b32.xlu0 %v587, 127
        %v607 = vpop.permute.xlu0 %606
        %608 = vrot.lane.b32.xlu0 %v586, 127
        %v609 = vpop.permute.xlu0 %608
        %610 = vrot.lane.b32.xlu0 %v590, 127
        %v611 = vpop.permute.xlu0 %610
        %612 = vrot.lane.b32.xlu0 %v592, 127
        %v613 = vpop.permute.xlu0 %612
        %614 = vrot.lane.b32.xlu0 %v591, 127
        %v615 = vpop.permute.xlu0 %614
        %616 = vrot.lane.b32.xlu0 %v595, 127
        %v617 = vpop.permute.xlu0 %616
        %618 = vrot.lane.b32.xlu0 %v597, 127
        %v619 = vpop.permute.xlu0 %618
        %620 = vrot.lane.b32.xlu0 %v596, 127
        %v621 = vpop.permute.xlu0 %620
        %v634 = vadd.f32 %v566, %v599
        %v635 = vadd.f32 %v567, %v601
        %v636 = vadd.f32 %v568, %v603
        %v637 = vadd.f32 %v569, %v605
        %v638 = vadd.f32 %v570, %v607
        %v639 = vadd.f32 %v571, %v609
        %v640 = vadd.f32 %v572, %v611
        %v641 = vadd.f32 %v573, %v613
        %v642 = vadd.f32 %v574, %v615
        %v643 = vadd.f32 %v575, %v617
        %v644 = vadd.f32 %v576, %v619
        %v645 = vadd.f32 %v577, %v621
        %646 = vrot.lane.b32.xlu0 %v536, 126
        %v647 = vpop.permute.xlu0 %646
        %648 = vrot.lane.b32.xlu0 %v538, 126
        %v649 = vpop.permute.xlu0 %648
        %650 = vrot.lane.b32.xlu0 %v537, 126
        %v651 = vpop.permute.xlu0 %650
        %652 = vrot.lane.b32.xlu0 %v541, 126
        %v653 = vpop.permute.xlu0 %652
        %654 = vrot.lane.b32.xlu0 %v543, 126
        %v655 = vpop.permute.xlu0 %654
        %656 = vrot.lane.b32.xlu0 %v542, 126
        %v657 = vpop.permute.xlu0 %656
        %658 = vrot.lane.b32.xlu0 %v546, 126
        %v659 = vpop.permute.xlu0 %658
        %660 = vrot.lane.b32.xlu0 %v548, 126
        %v661 = vpop.permute.xlu0 %660
        %662 = vrot.lane.b32.xlu0 %v547, 126
        %v663 = vpop.permute.xlu0 %662
        %664 = vrot.lane.b32.xlu0 %v551, 126
        %v665 = vpop.permute.xlu0 %664
        %666 = vrot.lane.b32.xlu0 %v553, 126
        %v667 = vpop.permute.xlu0 %666
        %668 = vrot.lane.b32.xlu0 %v552, 126
        %v669 = vpop.permute.xlu0 %668
        %v682 = vadd.f32 %v634, %v647
        %v683 = vadd.f32 %v635, %v649
        %v684 = vadd.f32 %v636, %v651
        %v685 = vadd.f32 %v637, %v653
        %v686 = vadd.f32 %v638, %v655
        %v687 = vadd.f32 %v639, %v657
        %v688 = vadd.f32 %v640, %v659
        %v689 = vadd.f32 %v641, %v661
        %v690 = vadd.f32 %v642, %v663
        %v691 = vadd.f32 %v643, %v665
        %v692 = vadd.f32 %v644, %v667
        %v693 = vadd.f32 %v645, %v669
        %v706 = vrot.slane %v189, 1
        %v707 = vrot.slane %v190, 1
        %v708 = vsel %vm348, %v706, %v707
        %v709 = vrot.slane %v191, 1
        %v710 = vsel %vm348, %v707, %v709
        %v711 = vrot.slane %v192, 1
        %v712 = vrot.slane %v193, 1
        %v713 = vsel %vm348, %v711, %v712
        %v714 = vrot.slane %v194, 1
        %v715 = vsel %vm348, %v712, %v714
        %v716 = vrot.slane %v195, 1
        %v717 = vrot.slane %v196, 1
        %v718 = vsel %vm348, %v716, %v717
        %v719 = vrot.slane %v197, 1
        %v720 = vsel %vm348, %v717, %v719
        %v721 = vrot.slane %v198, 1
        %v722 = vrot.slane %v199, 1
        %v723 = vsel %vm348, %v721, %v722
        %v724 = vrot.slane %v200, 1
        %v725 = vsel %vm348, %v722, %v724
        %726 = vrot.lane.b32.xlu0 %v708, 127
        %v727 = vpop.permute.xlu0 %726
        %728 = vrot.lane.b32.xlu0 %v710, 127
        %v729 = vpop.permute.xlu0 %728
        %730 = vrot.lane.b32.xlu0 %v709, 127
        %v731 = vpop.permute.xlu0 %730
        %732 = vrot.lane.b32.xlu0 %v713, 127
        %v733 = vpop.permute.xlu0 %732
        %734 = vrot.lane.b32.xlu0 %v715, 127
        %v735 = vpop.permute.xlu0 %734
        %736 = vrot.lane.b32.xlu0 %v714, 127
        %v737 = vpop.permute.xlu0 %736
        %738 = vrot.lane.b32.xlu0 %v718, 127
        %v739 = vpop.permute.xlu0 %738
        %740 = vrot.lane.b32.xlu0 %v720, 127
        %v741 = vpop.permute.xlu0 %740
        %742 = vrot.lane.b32.xlu0 %v719, 127
        %v743 = vpop.permute.xlu0 %742
        %744 = vrot.lane.b32.xlu0 %v723, 127
        %v745 = vpop.permute.xlu0 %744
        %746 = vrot.lane.b32.xlu0 %v725, 127
        %v747 = vpop.permute.xlu0 %746
        %748 = vrot.lane.b32.xlu0 %v724, 127
        %v749 = vpop.permute.xlu0 %748
        %v762 = vsub.f32 %v682, %v727
        %v763 = vsub.f32 %v683, %v729
        %v764 = vsub.f32 %v684, %v731
        %v765 = vsub.f32 %v685, %v733
        %v766 = vsub.f32 %v686, %v735
        %v767 = vsub.f32 %v687, %v737
        %v768 = vsub.f32 %v688, %v739
        %v769 = vsub.f32 %v689, %v741
        %v770 = vsub.f32 %v690, %v743
        %v771 = vsub.f32 %v691, %v745
        %v772 = vsub.f32 %v692, %v747
        %v773 = vsub.f32 %v693, %v749
        %v774 = vmul.f32 %v201, %v762
        %v775 = vmul.f32 %v202, %v763
        %v776 = vmul.f32 %v203, %v764
        %v777 = vmul.f32 %v201, %v765
        %v778 = vmul.f32 %v202, %v766
        %v779 = vmul.f32 %v203, %v767
        %v780 = vmul.f32 %v201, %v768
        %v781 = vmul.f32 %v202, %v769
        %v782 = vmul.f32 %v203, %v770
        %v783 = vmul.f32 %v201, %v771
        %v784 = vmul.f32 %v202, %v772
        %v785 = vmul.f32 %v203, %v773
        %vm798 = vcmask 1040384
        %v799 = vrot.slane %v774, 7
        %v800 = vrot.slane %v775, 7
        %v801 = vsel %vm798, %v799, %v800
        %v802 = vrot.slane %v776, 7
        %v803 = vsel %vm798, %v800, %v802
        %v804 = vrot.slane %v777, 7
        %v805 = vrot.slane %v778, 7
        %v806 = vsel %vm798, %v804, %v805
        %v807 = vrot.slane %v779, 7
        %v808 = vsel %vm798, %v805, %v807
        %v809 = vrot.slane %v780, 7
        %v810 = vrot.slane %v781, 7
        %v811 = vsel %vm798, %v809, %v810
        %v812 = vrot.slane %v782, 7
        %v813 = vsel %vm798, %v810, %v812
        %v814 = vrot.slane %v783, 7
        %v815 = vrot.slane %v784, 7
        %v816 = vsel %vm798, %v814, %v815
        %v817 = vrot.slane %v785, 7
        %v818 = vsel %vm798, %v815, %v817
        %819 = vrot.lane.b32.xlu0 %v799, 1
        %v820 = vpop.permute.xlu0 %819
        %821 = vrot.lane.b32.xlu0 %v801, 1
        %v822 = vpop.permute.xlu0 %821
        %823 = vrot.lane.b32.xlu0 %v803, 1
        %v824 = vpop.permute.xlu0 %823
        %825 = vrot.lane.b32.xlu0 %v804, 1
        %v826 = vpop.permute.xlu0 %825
        %827 = vrot.lane.b32.xlu0 %v806, 1
        %v828 = vpop.permute.xlu0 %827
        %829 = vrot.lane.b32.xlu0 %v808, 1
        %v830 = vpop.permute.xlu0 %829
        %831 = vrot.lane.b32.xlu0 %v809, 1
        %v832 = vpop.permute.xlu0 %831
        %833 = vrot.lane.b32.xlu0 %v811, 1
        %v834 = vpop.permute.xlu0 %833
        %835 = vrot.lane.b32.xlu0 %v813, 1
        %v836 = vpop.permute.xlu0 %835
        %837 = vrot.lane.b32.xlu0 %v814, 1
        %v838 = vpop.permute.xlu0 %837
        %839 = vrot.lane.b32.xlu0 %v816, 1
        %v840 = vpop.permute.xlu0 %839
        %841 = vrot.lane.b32.xlu0 %v818, 1
        %v842 = vpop.permute.xlu0 %841
        %v855 = vadd.f32 %v189, %v820
        %v856 = vadd.f32 %v190, %v822
        %v857 = vadd.f32 %v191, %v824
        %v858 = vadd.f32 %v192, %v826
        %v859 = vadd.f32 %v193, %v828
        %v860 = vadd.f32 %v194, %v830
        %v861 = vadd.f32 %v195, %v832
        %v862 = vadd.f32 %v196, %v834
        %v863 = vadd.f32 %v197, %v836
        %v864 = vadd.f32 %v198, %v838
        %v865 = vadd.f32 %v199, %v840
        %v866 = vadd.f32 %v200, %v842
        %v867 = vld [vmem:[%s166] sm:$0xff]
        %v868 = vld [vmem:[%s166 + $0x8] sm:$0xff]
        %v869 = vld [vmem:[%s166 + $0x10] sm:$0xff]
        %v870 = vld [vmem:[%s166 + $0x18] sm:$0xff]
        %v871 = vld [vmem:[%s166 + $0x20] sm:$0xff]
        %v872 = vld [vmem:[%s166 + $0x28] sm:$0xff]
        %v873 = vld [vmem:[%s166 + $0x30] sm:$0xff]
        %v874 = vld [vmem:[%s166 + $0x38] sm:$0xff]
        %vm875 = vcmp.lt.f32.partialorder %v867, 0.9375
        %vm876 = vcmp.lt.f32.partialorder %v868, 0.9375
        %vm877 = vcmp.lt.f32.partialorder %v869, 0.9375
        %vm878 = vcmp.lt.f32.partialorder %v870, 0.9375
        %vm879 = vcmp.lt.f32.partialorder %v871, 0.9375
        %vm880 = vcmp.lt.f32.partialorder %v872, 0.9375
        %vm881 = vcmp.lt.f32.partialorder %v873, 0.9375
        %vm882 = vcmp.lt.f32.partialorder %v874, 0.9375
        %vm895 = vcmask 1044480
        %v896 = vrot.slane %v855, 3
        %v897 = vrot.slane %v856, 3
        %v898 = vsel %vm895, %v896, %v897
        %v899 = vrot.slane %v857, 3
        %v900 = vsel %vm895, %v897, %v899
        %v901 = vrot.slane %v858, 3
        %v902 = vrot.slane %v859, 3
        %v903 = vsel %vm895, %v901, %v902
        %v904 = vrot.slane %v860, 3
        %v905 = vsel %vm895, %v902, %v904
        %v906 = vrot.slane %v861, 3
        %v907 = vrot.slane %v862, 3
        %v908 = vsel %vm895, %v906, %v907
        %v909 = vrot.slane %v863, 3
        %v910 = vsel %vm895, %v907, %v909
        %v911 = vrot.slane %v864, 3
        %v912 = vrot.slane %v865, 3
        %v913 = vsel %vm895, %v911, %v912
        %v914 = vrot.slane %v866, 3
        %v915 = vsel %vm895, %v912, %v914
        %916 = vrot.lane.b32.xlu0 %v898, 126
        %v917 = vpop.permute.xlu0 %916
        %918 = vrot.lane.b32.xlu0 %v900, 126
        %v919 = vpop.permute.xlu0 %918
        %920 = vrot.lane.b32.xlu0 %v903, 126
        %v921 = vpop.permute.xlu0 %920
        %922 = vrot.lane.b32.xlu0 %v905, 126
        %v923 = vpop.permute.xlu0 %922
        %924 = vrot.lane.b32.xlu0 %v908, 126
        %v925 = vpop.permute.xlu0 %924
        %926 = vrot.lane.b32.xlu0 %v910, 126
        %v927 = vpop.permute.xlu0 %926
        %928 = vrot.lane.b32.xlu0 %v913, 126
        %v929 = vpop.permute.xlu0 %928
        %930 = vrot.lane.b32.xlu0 %v915, 126
        %v931 = vpop.permute.xlu0 %930
        %940 = vrot.lane.b32.xlu0 %v898, 125
        %v941 = vpop.permute.xlu0 %940
        %942 = vrot.lane.b32.xlu0 %v900, 125
        %v943 = vpop.permute.xlu0 %942
        %944 = vrot.lane.b32.xlu0 %v903, 125
        %v945 = vpop.permute.xlu0 %944
        %946 = vrot.lane.b32.xlu0 %v905, 125
        %v947 = vpop.permute.xlu0 %946
        %948 = vrot.lane.b32.xlu0 %v908, 125
        %v949 = vpop.permute.xlu0 %948
        %950 = vrot.lane.b32.xlu0 %v910, 125
        %v951 = vpop.permute.xlu0 %950
        %952 = vrot.lane.b32.xlu0 %v913, 125
        %v953 = vpop.permute.xlu0 %952
        %954 = vrot.lane.b32.xlu0 %v915, 125
        %v955 = vpop.permute.xlu0 %954
        %v964 = vsel %vm875, %v917, %v941
        %v965 = vsel %vm876, %v919, %v943
        %v966 = vsel %vm877, %v921, %v945
        %v967 = vsel %vm878, %v923, %v947
        %v968 = vsel %vm879, %v925, %v949
        %v969 = vsel %vm880, %v927, %v951
        %v970 = vsel %vm881, %v929, %v953
        %v971 = vsel %vm882, %v931, %v955
        %vm972 = vcmp.lt.f32.partialorder %v867, 0.8125
        %vm973 = vcmp.lt.f32.partialorder %v868, 0.8125
        %vm974 = vcmp.lt.f32.partialorder %v869, 0.8125
        %vm975 = vcmp.lt.f32.partialorder %v870, 0.8125
        %vm976 = vcmp.lt.f32.partialorder %v871, 0.8125
        %vm977 = vcmp.lt.f32.partialorder %v872, 0.8125
        %vm978 = vcmp.lt.f32.partialorder %v873, 0.8125
        %vm979 = vcmp.lt.f32.partialorder %v874, 0.8125
        %980 = vrot.lane.b32.xlu0 %v898, 127
        %v981 = vpop.permute.xlu0 %980
        %982 = vrot.lane.b32.xlu0 %v900, 127
        %v983 = vpop.permute.xlu0 %982
        %984 = vrot.lane.b32.xlu0 %v903, 127
        %v985 = vpop.permute.xlu0 %984
        %986 = vrot.lane.b32.xlu0 %v905, 127
        %v987 = vpop.permute.xlu0 %986
        %988 = vrot.lane.b32.xlu0 %v908, 127
        %v989 = vpop.permute.xlu0 %988
        %990 = vrot.lane.b32.xlu0 %v910, 127
        %v991 = vpop.permute.xlu0 %990
        %992 = vrot.lane.b32.xlu0 %v913, 127
        %v993 = vpop.permute.xlu0 %992
        %994 = vrot.lane.b32.xlu0 %v915, 127
        %v995 = vpop.permute.xlu0 %994
        %v1004 = vsel %vm972, %v981, %v964
        %v1005 = vsel %vm973, %v983, %v965
        %v1006 = vsel %vm974, %v985, %v966
        %v1007 = vsel %vm975, %v987, %v967
        %v1008 = vsel %vm976, %v989, %v968
        %v1009 = vsel %vm977, %v991, %v969
        %v1010 = vsel %vm978, %v993, %v970
        %v1011 = vsel %vm979, %v995, %v971
        %vm1012 = vcmp.lt.f32.partialorder %v867, 0.75
        %vm1013 = vcmp.lt.f32.partialorder %v868, 0.75
        %vm1014 = vcmp.lt.f32.partialorder %v869, 0.75
        %vm1015 = vcmp.lt.f32.partialorder %v870, 0.75
        %vm1016 = vcmp.lt.f32.partialorder %v871, 0.75
        %vm1017 = vcmp.lt.f32.partialorder %v872, 0.75
        %vm1018 = vcmp.lt.f32.partialorder %v873, 0.75
        %vm1019 = vcmp.lt.f32.partialorder %v874, 0.75
        %v1020 = vrot.slane %v855, 2
        %v1021 = vrot.slane %v856, 2
        %v1022 = vsel %vm533, %v1020, %v1021
        %v1023 = vrot.slane %v857, 2
        %v1024 = vsel %vm533, %v1021, %v1023
        %v1025 = vrot.slane %v858, 2
        %v1026 = vrot.slane %v859, 2
        %v1027 = vsel %vm533, %v1025, %v1026
        %v1028 = vrot.slane %v860, 2
        %v1029 = vsel %vm533, %v1026, %v1028
        %v1030 = vrot.slane %v861, 2
        %v1031 = vrot.slane %v862, 2
        %v1032 = vsel %vm533, %v1030, %v1031
        %v1033 = vrot.slane %v863, 2
        %v1034 = vsel %vm533, %v1031, %v1033
        %v1035 = vrot.slane %v864, 2
        %v1036 = vrot.slane %v865, 2
        %v1037 = vsel %vm533, %v1035, %v1036
        %v1038 = vrot.slane %v866, 2
        %v1039 = vsel %vm533, %v1036, %v1038
        %1040 = vrot.lane.b32.xlu0 %v1022, 125
        %v1041 = vpop.permute.xlu0 %1040
        %1042 = vrot.lane.b32.xlu0 %v1024, 125
        %v1043 = vpop.permute.xlu0 %1042
        %1044 = vrot.lane.b32.xlu0 %v1027, 125
        %v1045 = vpop.permute.xlu0 %1044
        %1046 = vrot.lane.b32.xlu0 %v1029, 125
        %v1047 = vpop.permute.xlu0 %1046
        %1048 = vrot.lane.b32.xlu0 %v1032, 125
        %v1049 = vpop.permute.xlu0 %1048
        %1050 = vrot.lane.b32.xlu0 %v1034, 125
        %v1051 = vpop.permute.xlu0 %1050
        %1052 = vrot.lane.b32.xlu0 %v1037, 125
        %v1053 = vpop.permute.xlu0 %1052
        %1054 = vrot.lane.b32.xlu0 %v1039, 125
        %v1055 = vpop.permute.xlu0 %1054
        %v1064 = vsel %vm1012, %v1041, %v1004
        %v1065 = vsel %vm1013, %v1043, %v1005
        %v1066 = vsel %vm1014, %v1045, %v1006
        %v1067 = vsel %vm1015, %v1047, %v1007
        %v1068 = vsel %vm1016, %v1049, %v1008
        %v1069 = vsel %vm1017, %v1051, %v1009
        %v1070 = vsel %vm1018, %v1053, %v1010
        %v1071 = vsel %vm1019, %v1055, %v1011
        %vm1072 = vcmp.lt.f32.partialorder %v867, 0.625
        %vm1073 = vcmp.lt.f32.partialorder %v868, 0.625
        %vm1074 = vcmp.lt.f32.partialorder %v869, 0.625
        %vm1075 = vcmp.lt.f32.partialorder %v870, 0.625
        %vm1076 = vcmp.lt.f32.partialorder %v871, 0.625
        %vm1077 = vcmp.lt.f32.partialorder %v872, 0.625
        %vm1078 = vcmp.lt.f32.partialorder %v873, 0.625
        %vm1079 = vcmp.lt.f32.partialorder %v874, 0.625
        %1080 = vrot.lane.b32.xlu0 %v1022, 126
        %v1081 = vpop.permute.xlu0 %1080
        %1082 = vrot.lane.b32.xlu0 %v1024, 126
        %v1083 = vpop.permute.xlu0 %1082
        %1084 = vrot.lane.b32.xlu0 %v1027, 126
        %v1085 = vpop.permute.xlu0 %1084
        %1086 = vrot.lane.b32.xlu0 %v1029, 126
        %v1087 = vpop.permute.xlu0 %1086
        %1088 = vrot.lane.b32.xlu0 %v1032, 126
        %v1089 = vpop.permute.xlu0 %1088
        %1090 = vrot.lane.b32.xlu0 %v1034, 126
        %v1091 = vpop.permute.xlu0 %1090
        %1092 = vrot.lane.b32.xlu0 %v1037, 126
        %v1093 = vpop.permute.xlu0 %1092
        %1094 = vrot.lane.b32.xlu0 %v1039, 126
        %v1095 = vpop.permute.xlu0 %1094
        %v1104 = vsel %vm1072, %v1081, %v1064
        %v1105 = vsel %vm1073, %v1083, %v1065
        %v1106 = vsel %vm1074, %v1085, %v1066
        %v1107 = vsel %vm1075, %v1087, %v1067
        %v1108 = vsel %vm1076, %v1089, %v1068
        %v1109 = vsel %vm1077, %v1091, %v1069
        %v1110 = vsel %vm1078, %v1093, %v1070
        %v1111 = vsel %vm1079, %v1095, %v1071
        %vm1112 = vcmp.lt.f32.partialorder %v867, 0.375
        %vm1113 = vcmp.lt.f32.partialorder %v868, 0.375
        %vm1114 = vcmp.lt.f32.partialorder %v869, 0.375
        %vm1115 = vcmp.lt.f32.partialorder %v870, 0.375
        %vm1116 = vcmp.lt.f32.partialorder %v871, 0.375
        %vm1117 = vcmp.lt.f32.partialorder %v872, 0.375
        %vm1118 = vcmp.lt.f32.partialorder %v873, 0.375
        %vm1119 = vcmp.lt.f32.partialorder %v874, 0.375
        %1120 = vrot.lane.b32.xlu0 %v1022, 127
        %v1121 = vpop.permute.xlu0 %1120
        %1122 = vrot.lane.b32.xlu0 %v1024, 127
        %v1123 = vpop.permute.xlu0 %1122
        %1124 = vrot.lane.b32.xlu0 %v1027, 127
        %v1125 = vpop.permute.xlu0 %1124
        %1126 = vrot.lane.b32.xlu0 %v1029, 127
        %v1127 = vpop.permute.xlu0 %1126
        %1128 = vrot.lane.b32.xlu0 %v1032, 127
        %v1129 = vpop.permute.xlu0 %1128
        %1130 = vrot.lane.b32.xlu0 %v1034, 127
        %v1131 = vpop.permute.xlu0 %1130
        %1132 = vrot.lane.b32.xlu0 %v1037, 127
        %v1133 = vpop.permute.xlu0 %1132
        %1134 = vrot.lane.b32.xlu0 %v1039, 127
        %v1135 = vpop.permute.xlu0 %1134
        %v1144 = vsel %vm1112, %v1121, %v1104
        %v1145 = vsel %vm1113, %v1123, %v1105
        %v1146 = vsel %vm1114, %v1125, %v1106
        %v1147 = vsel %vm1115, %v1127, %v1107
        %v1148 = vsel %vm1116, %v1129, %v1108
        %v1149 = vsel %vm1117, %v1131, %v1109
        %v1150 = vsel %vm1118, %v1133, %v1110
        %v1151 = vsel %vm1119, %v1135, %v1111
        %vm1152 = vcmp.lt.f32.partialorder %v867, 0.25
        %vm1153 = vcmp.lt.f32.partialorder %v868, 0.25
        %vm1154 = vcmp.lt.f32.partialorder %v869, 0.25
        %vm1155 = vcmp.lt.f32.partialorder %v870, 0.25
        %vm1156 = vcmp.lt.f32.partialorder %v871, 0.25
        %vm1157 = vcmp.lt.f32.partialorder %v872, 0.25
        %vm1158 = vcmp.lt.f32.partialorder %v873, 0.25
        %vm1159 = vcmp.lt.f32.partialorder %v874, 0.25
        %v1160 = vrot.slane %v855, 1
        %v1161 = vrot.slane %v856, 1
        %v1162 = vsel %vm348, %v1160, %v1161
        %v1163 = vrot.slane %v857, 1
        %v1164 = vsel %vm348, %v1161, %v1163
        %v1165 = vrot.slane %v858, 1
        %v1166 = vrot.slane %v859, 1
        %v1167 = vsel %vm348, %v1165, %v1166
        %v1168 = vrot.slane %v860, 1
        %v1169 = vsel %vm348, %v1166, %v1168
        %v1170 = vrot.slane %v861, 1
        %v1171 = vrot.slane %v862, 1
        %v1172 = vsel %vm348, %v1170, %v1171
        %v1173 = vrot.slane %v863, 1
        %v1174 = vsel %vm348, %v1171, %v1173
        %v1175 = vrot.slane %v864, 1
        %v1176 = vrot.slane %v865, 1
        %v1177 = vsel %vm348, %v1175, %v1176
        %v1178 = vrot.slane %v866, 1
        %v1179 = vsel %vm348, %v1176, %v1178
        %1180 = vrot.lane.b32.xlu0 %v1162, 125
        %v1181 = vpop.permute.xlu0 %1180
        %1182 = vrot.lane.b32.xlu0 %v1164, 125
        %v1183 = vpop.permute.xlu0 %1182
        %1184 = vrot.lane.b32.xlu0 %v1167, 125
        %v1185 = vpop.permute.xlu0 %1184
        %1186 = vrot.lane.b32.xlu0 %v1169, 125
        %v1187 = vpop.permute.xlu0 %1186
        %1188 = vrot.lane.b32.xlu0 %v1172, 125
        %v1189 = vpop.permute.xlu0 %1188
        %1190 = vrot.lane.b32.xlu0 %v1174, 125
        %v1191 = vpop.permute.xlu0 %1190
        %1192 = vrot.lane.b32.xlu0 %v1177, 125
        %v1193 = vpop.permute.xlu0 %1192
        %1194 = vrot.lane.b32.xlu0 %v1179, 125
        %v1195 = vpop.permute.xlu0 %1194
        %v1204 = vsel %vm1152, %v1181, %v1144
        %v1205 = vsel %vm1153, %v1183, %v1145
        %v1206 = vsel %vm1154, %v1185, %v1146
        %v1207 = vsel %vm1155, %v1187, %v1147
        %v1208 = vsel %vm1156, %v1189, %v1148
        %v1209 = vsel %vm1157, %v1191, %v1149
        %v1210 = vsel %vm1158, %v1193, %v1150
        %v1211 = vsel %vm1159, %v1195, %v1151
        %vm1212 = vcmp.lt.f32.partialorder %v867, 0.1875
        %vm1213 = vcmp.lt.f32.partialorder %v868, 0.1875
        %vm1214 = vcmp.lt.f32.partialorder %v869, 0.1875
        %vm1215 = vcmp.lt.f32.partialorder %v870, 0.1875
        %vm1216 = vcmp.lt.f32.partialorder %v871, 0.1875
        %vm1217 = vcmp.lt.f32.partialorder %v872, 0.1875
        %vm1218 = vcmp.lt.f32.partialorder %v873, 0.1875
        %vm1219 = vcmp.lt.f32.partialorder %v874, 0.1875
        %1220 = vrot.lane.b32.xlu0 %v1162, 126
        %v1221 = vpop.permute.xlu0 %1220
        %1222 = vrot.lane.b32.xlu0 %v1164, 126
        %v1223 = vpop.permute.xlu0 %1222
        %1224 = vrot.lane.b32.xlu0 %v1167, 126
        %v1225 = vpop.permute.xlu0 %1224
        %1226 = vrot.lane.b32.xlu0 %v1169, 126
        %v1227 = vpop.permute.xlu0 %1226
        %1228 = vrot.lane.b32.xlu0 %v1172, 126
        %v1229 = vpop.permute.xlu0 %1228
        %1230 = vrot.lane.b32.xlu0 %v1174, 126
        %v1231 = vpop.permute.xlu0 %1230
        %1232 = vrot.lane.b32.xlu0 %v1177, 126
        %v1233 = vpop.permute.xlu0 %1232
        %1234 = vrot.lane.b32.xlu0 %v1179, 126
        %v1235 = vpop.permute.xlu0 %1234
        %v1244 = vsel %vm1212, %v1221, %v1204
        %v1245 = vsel %vm1213, %v1223, %v1205
        %v1246 = vsel %vm1214, %v1225, %v1206
        %v1247 = vsel %vm1215, %v1227, %v1207
        %v1248 = vsel %vm1216, %v1229, %v1208
        %v1249 = vsel %vm1217, %v1231, %v1209
        %v1250 = vsel %vm1218, %v1233, %v1210
        %v1251 = vsel %vm1219, %v1235, %v1211
        %vm1252 = vcmp.lt.f32.partialorder %v867, 0.0625
        %vm1253 = vcmp.lt.f32.partialorder %v868, 0.0625
        %vm1254 = vcmp.lt.f32.partialorder %v869, 0.0625
        %vm1255 = vcmp.lt.f32.partialorder %v870, 0.0625
        %vm1256 = vcmp.lt.f32.partialorder %v871, 0.0625
        %vm1257 = vcmp.lt.f32.partialorder %v872, 0.0625
        %vm1258 = vcmp.lt.f32.partialorder %v873, 0.0625
        %vm1259 = vcmp.lt.f32.partialorder %v874, 0.0625
        %1260 = vrot.lane.b32.xlu0 %v1162, 127
        %v1261 = vpop.permute.xlu0 %1260
        %1262 = vrot.lane.b32.xlu0 %v1164, 127
        %v1263 = vpop.permute.xlu0 %1262
        %1264 = vrot.lane.b32.xlu0 %v1167, 127
        %v1265 = vpop.permute.xlu0 %1264
        %1266 = vrot.lane.b32.xlu0 %v1169, 127
        %v1267 = vpop.permute.xlu0 %1266
        %1268 = vrot.lane.b32.xlu0 %v1172, 127
        %v1269 = vpop.permute.xlu0 %1268
        %1270 = vrot.lane.b32.xlu0 %v1174, 127
        %v1271 = vpop.permute.xlu0 %1270
        %1272 = vrot.lane.b32.xlu0 %v1177, 127
        %v1273 = vpop.permute.xlu0 %1272
        %1274 = vrot.lane.b32.xlu0 %v1179, 127
        %v1275 = vpop.permute.xlu0 %1274
        %v1284 = vsel %vm1252, %v1261, %v1244
        %v1285 = vsel %vm1253, %v1263, %v1245
        %v1286 = vsel %vm1254, %v1265, %v1246
        %v1287 = vsel %vm1255, %v1267, %v1247
        %v1288 = vsel %vm1256, %v1269, %v1248
        %v1289 = vsel %vm1257, %v1271, %v1249
        %v1290 = vsel %vm1258, %v1273, %v1250
        %v1291 = vsel %vm1259, %v1275, %v1251
        %v1292 = vmax.f32 %v1284, 0.0
        %v1293 = vmax.f32 %v1285, 0.0
        %v1294 = vmax.f32 %v1286, 0.0
        %v1295 = vmax.f32 %v1287, 0.0
        %v1296 = vmax.f32 %v1288, 0.0
        %v1297 = vmax.f32 %v1289, 0.0
        %v1298 = vmax.f32 %v1290, 0.0
        %v1299 = vmax.f32 %v1291, 0.0
        %v1300 = vmin.f32 %v1292, 1.0
        %v1301 = vmin.f32 %v1293, 1.0
        %v1302 = vmin.f32 %v1294, 1.0
        %v1303 = vmin.f32 %v1295, 1.0
        %v1304 = vmin.f32 %v1296, 1.0
        %v1305 = vmin.f32 %v1297, 1.0
        %v1306 = vmin.f32 %v1298, 1.0
        %v1307 = vmin.f32 %v1299, 1.0
        %vm1308 = vcmask 130048
        %1309 = vst.msk [vmem:[%s188] sm:$0xff] %vm1308, %v1300
        %1310 = vst.msk [vmem:[%s188 + $0x8] sm:$0xff] %vm1308, %v1301
        %1311 = vst.msk [vmem:[%s188 + $0x10] sm:$0xff] %vm1308, %v1302
        %1312 = vst.msk [vmem:[%s188 + $0x18] sm:$0xff] %vm1308, %v1303
        %1313 = vst.msk [vmem:[%s188 + $0x20] sm:$0xff] %vm1308, %v1304
        %1314 = vst.msk [vmem:[%s188 + $0x28] sm:$0xff] %vm1308, %v1305
        %1315 = vst.msk [vmem:[%s188 + $0x30] sm:$0xff] %vm1308, %v1306
        %1316 = vst.msk [vmem:[%s188 + $0x38] sm:$0xff] %vm1308, %v1307
        %s1317 = sand.u32 %s96, 1
        %s1318 = scalar_lea.sflag [#allocation4], %s1317
        %s1319 = sand.u32 %s96, 1
        %s1320 = smul.addr %s1319, 64
        %s1321 = scalar_lea.vmem [#allocation5], %s1320
        // Predicated region
        $region37: #{tpu_custom_call.1} parent=31 // pred_check
          %p1322 = pneg %p106
        $region38: #{tpu_custom_call.1} parent=31 // pred_check_branch
          %1324 = sbr.rel (%p1322) target = $region40
        $region39: #{tpu_custom_call.1} parent=31 // pred_region
          %s1326 = ssub.s32 1024, 1024
          %1327 = vsyncadd %s1318, %s1326
          %s1328 = smul.addr %s20, 8
          %s1329 = smul.addr %s1328, 128
          %s1330 = scalar_lea.hbm %s3, %s1329
          %s1331 = sshll.u32 %s1321, 4
          %s1332 = int_to_ptr.vmem [resolvable:$true] %s1331
          %1337 = dma.vmem_to_hbm [thread:$0]  %s1332, 1024, %s1330, %s1318, 128, 128, 8
        $region40: #{tpu_custom_call.1} parent=31 // pred_fallthru
          _
      $region32: #{tpu_custom_call.1} parent=5 // pred_fallthru
        _
      %p1338 = scmp.le.s32.totalorder 2, %s15
      // Predicated region
      $region41: #{tpu_custom_call.1} parent=5 // pred_check
        %p1339 = pneg %p1338
      $region42: #{tpu_custom_call.1} parent=5 // pred_check_branch
        %1341 = sbr.rel (%p1339) target = $region44
      $region43: #{tpu_custom_call.1} parent=5 // pred_region
        %s1342 = ssub.s32 %s15, 2
        // Predicated region
        $region45: #{tpu_custom_call.1} parent=43 // pred_check
          %p1343 = pneg %p112
        $region46: #{tpu_custom_call.1} parent=43 // pred_check_branch
          %1345 = sbr.rel (%p1343) target = $region48
        $region47: #{tpu_custom_call.1} parent=43 // pred_region
          %s1346 = sand.u32 %s97, 1
          %s1347 = scalar_lea.sflag [#allocation4], %s1346
          %s1348 = sand.u32 %s97, 1
          %s1349 = smul.addr %s1348, 64
          %s1350 = scalar_lea.vmem [#allocation5], %s1349
          %1351 = dma.done %s1347, 1024
        $region48: #{tpu_custom_call.1} parent=43 // pred_fallthru
          _
      $region44: #{tpu_custom_call.1} parent=5 // pred_fallthru
        _
    $region6: #{tpu_custom_call.1} parent=1 // loop_footer
      %s19 = sadd.s32 1, %s15
    $region7: #{tpu_custom_call.1} parent=1 // loop_footer_branch
      %14 = sbr.rel target = $region3
    $region8: #{tpu_custom_call.1} parent=1 // loop_exit
      _
    %1352 = vsyncpa [#allocation3], 1
    %s1353 = scalar_lea.sflag [#allocation3], 1
    %1354 = vsyncpa %s1353, 1
    %1355 = vsyncpa [#allocation4], 1
    %s1356 = scalar_lea.sflag [#allocation4], 1
    %1357 = vsyncpa %s1356, 1

</llo_original>
